<compile_context>
chip_gen: v5e
topology: v5e:2x2
jax: 0.10.0
libtpu: 0.0.40
codegen_flags: <defaults>
</compile_context>

<pallas_src>
import functools

import jax
import jax.numpy as jnp
from jax.experimental import pallas as pl
from jax.experimental.pallas import tpu as pltpu

_EPS = 1e-6          # F.pairwise_distance default eps
_LANES = 128


def _cdiv(a, b):
    return -(-a // b)


def _contrastive_loss_kernel(o1_ref, o2_ref, label_ref, out_ref, *,
                             margin, batch, needs_mask):
    gb = o1_ref.shape[0]          # static: 128-sample groups in this block
    i = pl.program_id(0)

    # In-kernel upcast: VPU convert hidden under the input DMA (v5e has no
    # bf16 VPU, so all arithmetic stays in f32 regardless of input dtype).
    o1 = o1_ref[...].astype(jnp.float32)              # (gb, 128, D)
    o2 = o2_ref[...].astype(jnp.float32)              # (gb, 128, D)

    diff = o1 - o2 + _EPS                             # (gb, 128, D)
    d2 = jnp.sum(diff * diff, axis=-1)                # (gb, 128) lane-dense
    d = jnp.sqrt(d2)                                  # EUP sqrt
    hinge = jnp.maximum(margin - d, 0.0)              # clamp(margin - d, 0)

    # Resident label: slice this block's 128-sample groups; result is already
    # (gb, 128) with samples along lanes -> no relayout.
    label = label_ref[pl.ds(i * gb, gb), :]           # (gb, 128) f32

    # Use d^2 directly for the similar-pair term (no sqrt->square round trip).
    per_sample = (1.0 - label) * d2 + label * (hinge * hinge)   # (gb, 128)

    def _emit(vals):
        # Lane-dense partial-sum tile for this block (reduced in XLA).
        out_ref[...] = jnp.broadcast_to(jnp.sum(vals), out_ref.shape)

    if needs_mask:
        # Only the last block contains padded rows; gate the mask there.
        last = pl.num_programs(0) - 1

        @pl.when(i == last)
        def _():
            g = jax.lax.broadcasted_iota(jnp.int32, (gb, _LANES), 0)
            lane = jax.lax.broadcasted_iota(jnp.int32, (gb, _LANES), 1)
            row = (i * gb + g) * _LANES + lane
            _emit(jnp.where(row < batch, per_sample, 0.0))

        @pl.when(i != last)
        def _():
            _emit(per_sample)
    else:
        _emit(per_sample)


def contrastive_loss(output1, output2, label, margin=2.0):
    """output1/output2: (B, D) floats, label: (B, 1) or (B,) -> scalar f32."""
    B, D = output1.shape
    assert output2.shape == (B, D)
    label = jnp.reshape(label, (B,)).astype(jnp.float32)

    itemsize = max(jnp.dtype(output1.dtype).itemsize,
                   jnp.dtype(output2.dtype).itemsize)

    # Per-generation scoped-VMEM limit: 64 MiB on 128-MiB parts (v5e/v6e),
    # 32 MiB on v7x (64 MiB physical).  Conservative fallback if the query
    # is unavailable.
    try:
        phys_vmem = int(pltpu.get_tpu_info().vmem_capacity_bytes)
    except Exception:  # pragma: no cover - query unavailable
        phys_vmem = 64 * 1024 * 1024
    if phys_vmem >= 128 * 1024 * 1024:
        vmem_limit = 64 * 1024 * 1024
    else:
        vmem_limit = 32 * 1024 * 1024

    # Number of 128-sample groups in the (padded) batch.
    G = _cdiv(B, _LANES)

    # VMEM bytes per 128-sample group inside one block:
    #   2 inputs x 2 pipeline buffers x (128*D*itemsize)
    # + ~4 f32 block-sized temporaries (o1/o2 upcasts, diff, diff^2).
    per_group = _LANES * D * (2 * 2 * itemsize + 4 * 4)
    # Resident label buffer: up to 2*G groups after padding, x2 buffers.
    label_vmem = 2 * (2 * G) * _LANES * 4
    usable = int(vmem_limit * 0.75) - label_vmem
    assert per_group <= usable, (
        "ContrastiveLoss Pallas kernel: a single 128-sample block does not "
        f"fit the VMEM budget (D={D}, B={B}); see TODO(synk) notes."
    )
    gb_cap = usable // per_group

    gb = int(min(G, gb_cap))
    # Megacore (v7x): guarantee >= 2 balanced blocks whenever there is enough
    # work, otherwise one TensorCore idles under dimension_semantics=parallel.
    if G >= 2 and gb >= G:
        gb = _cdiv(G, 2)

    G_pad = _cdiv(G, gb) * gb
    grid_b = G_pad // gb
    B_pad = G_pad * _LANES
    needs_mask = B_pad != B

    if needs_mask:
        pad = B_pad - B
        output1 = jnp.pad(output1, ((0, pad), (0, 0)))
        output2 = jnp.pad(output2, ((0, pad), (0, 0)))
        label = jnp.pad(label, ((0, pad),))

    # Free, contiguous packing: 128 samples per lane row.
    o1p = output1.reshape(G_pad, _LANES, D)
    o2p = output2.reshape(G_pad, _LANES, D)
    labp = label.reshape(G_pad, _LANES)

    kernel = functools.partial(
        _contrastive_loss_kernel,
        margin=float(margin), batch=B, needs_mask=needs_mask,
    )

    partials = pl.pallas_call(
        kernel,
        out_shape=jax.ShapeDtypeStruct((grid_b, 8, _LANES), jnp.float32),
        grid=(grid_b,),
        in_specs=[
            pl.BlockSpec((gb, _LANES, D), lambda i: (i, 0, 0)),
            pl.BlockSpec((gb, _LANES, D), lambda i: (i, 0, 0)),
            # Tiny label stays resident (constant block index -> single DMA).
            pl.BlockSpec((G_pad, _LANES), lambda i: (0, 0)),
        ],
        out_specs=pl.BlockSpec((1, 8, _LANES), lambda i: (i, 0, 0)),
        compiler_params=pltpu.CompilerParams(
            dimension_semantics=("parallel",),
            vmem_limit_bytes=vmem_limit,
        ),
        cost_estimate=pl.CostEstimate(
            flops=6 * B_pad * D,
            transcendentals=B_pad,
            bytes_accessed=(2 * B_pad * D * itemsize
                            + B_pad * 4
                            + grid_b * 8 * _LANES * 4),
        ),
    )(o1p, o2p, labp)

    # Tiny final reduce over per-block partials, then the mean.
    return jnp.sum(partials[:, 0, 0]) / B


def _reference(output1, output2, label, margin=2.0):
    # Pure-JAX reference mirroring the PyTorch forward.
    diff = (output1.astype(jnp.float32) - output2.astype(jnp.float32) + _EPS)
    d = jnp.sqrt(jnp.sum(diff * diff, axis=-1, keepdims=True))
    lab = jnp.reshape(label, (-1, 1)).astype(jnp.float32)
    per = (1.0 - lab) * d**2 + lab * jnp.maximum(margin - d, 0.0) ** 2
    return jnp.mean(per)


if __name__ == "__main__":
    key = jax.random.PRNGKey(0)
    k1, k2, k3, k4, k5, k6 = jax.random.split(key, 6)

    # Small shapes consistent with a siamese embedding head.
    B, D = 2, 32
    output1 = jax.random.normal(k1, (B, D), dtype=jnp.float32)
    output2 = jax.random.normal(k2, (B, D), dtype=jnp.float32)
    label = jax.random.bernoulli(k3, 0.5, (B, 1)).astype(jnp.float32)

    loss = jax.block_until_ready(contrastive_loss(output1, output2, label, margin=2.0))
    ref = _reference(output1, output2, label, margin=2.0)
    assert jnp.allclose(loss, ref, rtol=1e-5, atol=1e-5), (loss, ref)

    # Second config exercising the multi-block grid + last-block padding mask.
    B2, D2 = 300, 48
    o1b = jax.random.normal(k4, (B2, D2), dtype=jnp.float32)
    o2b = jax.random.normal(k5, (B2, D2), dtype=jnp.float32)
    labb = jax.random.bernoulli(k6, 0.5, (B2, 1)).astype(jnp.float32)
    loss2 = jax.block_until_ready(contrastive_loss(o1b, o2b, labb, margin=2.0))
    ref2 = _reference(o1b, o2b, labb, margin=2.0)
    assert jnp.allclose(loss2, ref2, rtol=1e-5, atol=1e-5), (loss2, ref2)

    print("KERNEL_OK")
</pallas_src>

<mosaic_0001>
module attributes {stable_mosaic.version = 11 : i64} {
  func.func @_contrastive_loss_kernel(%arg0: i32, %arg1: memref<1x128x32xf32, #tpu.memory_space<vmem>>, %arg2: memref<1x128x32xf32, #tpu.memory_space<vmem>>, %arg3: memref<1x128xf32, #tpu.memory_space<vmem>>, %arg4: memref<1x8x128xf32, #tpu.memory_space<vmem>>) attributes {dimension_semantics = [#tpu.dimension_semantics<parallel>], iteration_bounds = array<i64: 1>, scalar_prefetch = 0 : i64, scratch_operands = 0 : i64, tpu.core_type = #tpu.core_type<tc>, window_params = [{transform_indices = @transform_0, window_bounds = array<i64: 1, 128, 32>}, {transform_indices = @transform_1, window_bounds = array<i64: 1, 128, 32>}, {pipeline_mode = #tpu.pipeline_mode<synchronous>, transform_indices = @transform_2, window_bounds = array<i64: 1, 128>}, {transform_indices = @transform_3, window_bounds = array<i64: 1, 8, 128>}]} {
    %c0 = arith.constant 0 : index
    %c0_0 = arith.constant 0 : index
    %c0_1 = arith.constant 0 : index
    %0 = vector.load %arg1[%c0, %c0_0, %c0_1] : memref<1x128x32xf32, #tpu.memory_space<vmem>>, vector<1x128x32xf32>
    %c0_2 = arith.constant 0 : index
    %c0_3 = arith.constant 0 : index
    %c0_4 = arith.constant 0 : index
    %1 = vector.load %arg2[%c0_2, %c0_3, %c0_4] : memref<1x128x32xf32, #tpu.memory_space<vmem>>, vector<1x128x32xf32>
    %2 = arith.subf %0, %1 : vector<1x128x32xf32>
    %cst = arith.constant 9.99999997E-7 : f32
    %3 = vector.broadcast %cst : f32 to vector<1x128x32xf32>
    %4 = arith.addf %2, %3 : vector<1x128x32xf32>
    %5 = arith.mulf %4, %4 : vector<1x128x32xf32>
    %cst_5 = arith.constant dense<0.000000e+00> : vector<1x128xf32>
    %6 = vector.multi_reduction <add>, %5, %cst_5 [2] : vector<1x128x32xf32> to vector<1x128xf32>
    %7 = math.sqrt %6 : vector<1x128xf32>
    %cst_6 = arith.constant 2.000000e+00 : f32
    %8 = vector.broadcast %cst_6 : f32 to vector<1x128xf32>
    %9 = arith.subf %8, %7 : vector<1x128xf32>
    %cst_7 = arith.constant 0.000000e+00 : f32
    %10 = vector.broadcast %cst_7 : f32 to vector<1x128xf32>
    %11 = arith.maximumf %9, %10 : vector<1x128xf32>
    %c1_i32 = arith.constant 1 : i32
    %12 = arith.muli %arg0, %c1_i32 : i32
    %13 = arith.index_cast %12 : i32 to index
    %c0_8 = arith.constant 0 : index
    %14 = vector.load %arg3[%13, %c0_8] : memref<1x128xf32, #tpu.memory_space<vmem>>, vector<1x128xf32>
    %cst_9 = arith.constant 1.000000e+00 : f32
    %15 = vector.broadcast %cst_9 : f32 to vector<1x128xf32>
    %16 = arith.subf %15, %14 : vector<1x128xf32>
    %17 = arith.mulf %16, %6 : vector<1x128xf32>
    %18 = arith.mulf %11, %11 : vector<1x128xf32>
    %19 = arith.mulf %14, %18 : vector<1x128xf32>
    %20 = arith.addf %17, %19 : vector<1x128xf32>
    %c0_i32 = arith.constant 0 : i32
    %21 = arith.cmpi eq, %arg0, %c0_i32 : i32
    %22 = arith.extui %21 : i1 to i32
    %c0_i32_10 = arith.constant 0 : i32
    %23 = arith.cmpi ne, %22, %c0_i32_10 : i32
    scf.if %23 {
      %27 = tpu.iota {dimensions = array<i32: 0>} : vector<1x128xi32>
      %28 = tpu.iota {dimensions = array<i32: 1>} : vector<1x128xi32>
      %c1_i32_13 = arith.constant 1 : i32
      %29 = arith.muli %arg0, %c1_i32_13 : i32
      %30 = vector.broadcast %29 : i32 to vector<1x128xi32>
      %31 = arith.addi %30, %27 : vector<1x128xi32>
      %c128_i32 = arith.constant 128 : i32
      %32 = vector.broadcast %c128_i32 : i32 to vector<1x128xi32>
      %33 = arith.muli %31, %32 : vector<1x128xi32>
      %34 = arith.addi %33, %28 : vector<1x128xi32>
      %c2_i32 = arith.constant 2 : i32
      %35 = vector.broadcast %c2_i32 : i32 to vector<1x128xi32>
      %36 = arith.cmpi slt, %34, %35 : vector<1x128xi32>
      %cst_14 = arith.constant 0.000000e+00 : f32
      %37 = vector.broadcast %cst_14 : f32 to vector<1x128xf32>
      %38 = arith.select %36, %20, %37 : vector<1x128xi1>, vector<1x128xf32>
      %39 = vector.shape_cast %38 : vector<1x128xf32> to vector<1x1x128xf32>
      %cst_15 = arith.constant dense<0.000000e+00> : vector<1xf32>
      %40 = vector.multi_reduction <add>, %39, %cst_15 [1, 2] : vector<1x1x128xf32> to vector<1xf32>
      %41 = vector.shape_cast %40 : vector<1xf32> to vector<1x1x1xf32>
      %42 = vector.extract %41[0, 0, 0] : f32 from vector<1x1x1xf32>
      %43 = vector.broadcast %42 : f32 to vector<1x8x128xf32>
      %c0_16 = arith.constant 0 : index
      %c0_17 = arith.constant 0 : index
      %c0_18 = arith.constant 0 : index
      %44 = vector.load %arg4[%c0_16, %c0_17, %c0_18] : memref<1x8x128xf32, #tpu.memory_space<vmem>>, vector<1x8x128xf32>
      tpu.vector_store %arg4[%c0_16, %c0_17, %c0_18], %43 {strides = array<i32>} : memref<1x8x128xf32, #tpu.memory_space<vmem>>, vector<1x8x128xf32>,
    } else {
    }
    %c0_i32_11 = arith.constant 0 : i32
    %24 = arith.cmpi ne, %arg0, %c0_i32_11 : i32
    %25 = arith.extui %24 : i1 to i32
    %c0_i32_12 = arith.constant 0 : i32
    %26 = arith.cmpi ne, %25, %c0_i32_12 : i32
    scf.if %26 {
      %27 = vector.shape_cast %20 : vector<1x128xf32> to vector<1x1x128xf32>
      %cst_13 = arith.constant dense<0.000000e+00> : vector<1xf32>
      %28 = vector.multi_reduction <add>, %27, %cst_13 [1, 2] : vector<1x1x128xf32> to vector<1xf32>
      %29 = vector.shape_cast %28 : vector<1xf32> to vector<1x1x1xf32>
      %30 = vector.extract %29[0, 0, 0] : f32 from vector<1x1x1xf32>
      %31 = vector.broadcast %30 : f32 to vector<1x8x128xf32>
      %c0_14 = arith.constant 0 : index
      %c0_15 = arith.constant 0 : index
      %c0_16 = arith.constant 0 : index
      %32 = vector.load %arg4[%c0_14, %c0_15, %c0_16] : memref<1x8x128xf32, #tpu.memory_space<vmem>>, vector<1x8x128xf32>
      tpu.vector_store %arg4[%c0_14, %c0_15, %c0_16], %31 {strides = array<i32>} : memref<1x8x128xf32, #tpu.memory_space<vmem>>, vector<1x8x128xf32>,
    } else {
    }
    return
  }
  func.func @transform_0(%arg0: i32) -> (i32, i32, i32) {
    %c0_i32 = arith.constant 0 : i32
    %c0_i32_0 = arith.constant 0 : i32
    %c0_i32_1 = arith.constant 0 : i32
    return %arg0, %c0_i32, %c0_i32_0 : i32, i32, i32
  }
  func.func @transform_1(%arg0: i32) -> (i32, i32, i32) {
    %c0_i32 = arith.constant 0 : i32
    %c0_i32_0 = arith.constant 0 : i32
    %c0_i32_1 = arith.constant 0 : i32
    return %arg0, %c0_i32, %c0_i32_0 : i32, i32, i32
  }
  func.func @transform_2(%arg0: i32) -> (i32, i32) {
    %c0_i32 = arith.constant 0 : i32
    %c0_i32_0 = arith.constant 0 : i32
    %c0_i32_1 = arith.constant 0 : i32
    return %c0_i32, %c0_i32_0 : i32, i32
  }
  func.func @transform_3(%arg0: i32) -> (i32, i32, i32) {
    %c0_i32 = arith.constant 0 : i32
    %c0_i32_0 = arith.constant 0 : i32
    %c0_i32_1 = arith.constant 0 : i32
    return %arg0, %c0_i32, %c0_i32_0 : i32, i32, i32
  }
}

</mosaic_0001>

<llo_original>
// kernel: tpu_custom_call.1
$region0: #{tpu_custom_call.1}
  #allocation0 [shape = 'u32[]', space=smem, size = 0x4, offset = 0x4, fixed_abs, tag = 'smem constant byte address 0x4 - core index']
  #allocation1 [shape = 'u32[72,128]{1,0:T(1,128)}', space=vmem, size = 0x9000, scoped, tag = 'internal scratch']
  %s0 = inlined_call_operand.vmem [shape: f32[1,128,32], index: 0, kind: input, shape index: {}]
  %s1 = inlined_call_operand.vmem [shape: f32[1,128,32], index: 1, kind: input, shape index: {}]
  %s2 = inlined_call_operand.vmem [shape: f32[1,128], index: 2, kind: input, shape index: {}]
  %s3 = inlined_call_operand.hbm [shape: f32[1,8,128], index: 3, kind: output, shape index: {}]
  %s4 = sld [smem:[#allocation0]]
  $region30: #{tpu_custom_call.1} parent=0
    _
  %s6 = ssub.s32 1, %s4
  %s7 = scalar_select 0, %s6, %s4
  $region1: #{tpu_custom_call.1} parent=0
    #allocation2 [shape = 'u8[4096]{0}', space=vmem, size = 0x1000, scoped, tag = 'output window, operand 0, single buffered']
    #allocation3 [shape = 's32[1]{0}', space=sflag, size = 0x4, scoped, tag = 'scoped memory for tpu_custom_call.1']
    %8 = vsyncpa [#allocation3], 0
    // Predicated region
    $region2: #{tpu_custom_call.1} parent=1 // pred_check
      _
    $region3: #{tpu_custom_call.1} parent=1 // pred_check_branch
      %10 = sbr.rel (0) target = $region5
    $region4: #{tpu_custom_call.1} parent=1 // pred_region
      _
    $region5: #{tpu_custom_call.1} parent=1 // pred_fallthru
      _
    // Predicated region
    $region6: #{tpu_custom_call.1} parent=1 // pred_check
      _
    $region7: #{tpu_custom_call.1} parent=1 // pred_check_branch
      %12 = sbr.rel (0) target = $region9
    $region8: #{tpu_custom_call.1} parent=1 // pred_region
      _
    $region9: #{tpu_custom_call.1} parent=1 // pred_fallthru
      _
    // Predicated region
    $region10: #{tpu_custom_call.1} parent=1 // pred_check
      _
    $region11: #{tpu_custom_call.1} parent=1 // pred_check_branch
      %14 = sbr.rel (0) target = $region13
    $region12: #{tpu_custom_call.1} parent=1 // pred_region
      _
    $region13: #{tpu_custom_call.1} parent=1 // pred_fallthru
      _
    %v15 = vld [vmem:[%s0] sm:$0xff]
    %v16 = vld [vmem:[%s0 + $0x8] sm:$0xff]
    %v17 = vld [vmem:[%s0 + $0x10] sm:$0xff]
    %v18 = vld [vmem:[%s0 + $0x18] sm:$0xff]
    %v19 = vld [vmem:[%s0 + $0x20] sm:$0xff]
    %v20 = vld [vmem:[%s0 + $0x28] sm:$0xff]
    %v21 = vld [vmem:[%s0 + $0x30] sm:$0xff]
    %v22 = vld [vmem:[%s0 + $0x38] sm:$0xff]
    %v23 = vld [vmem:[%s0 + $0x40] sm:$0xff]
    %v24 = vld [vmem:[%s0 + $0x48] sm:$0xff]
    %v25 = vld [vmem:[%s0 + $0x50] sm:$0xff]
    %v26 = vld [vmem:[%s0 + $0x58] sm:$0xff]
    %v27 = vld [vmem:[%s0 + $0x60] sm:$0xff]
    %v28 = vld [vmem:[%s0 + $0x68] sm:$0xff]
    %v29 = vld [vmem:[%s0 + $0x70] sm:$0xff]
    %v30 = vld [vmem:[%s0 + $0x78] sm:$0xff]
    %v31 = vld [vmem:[%s1] sm:$0xff]
    %v32 = vld [vmem:[%s1 + $0x8] sm:$0xff]
    %v33 = vld [vmem:[%s1 + $0x10] sm:$0xff]
    %v34 = vld [vmem:[%s1 + $0x18] sm:$0xff]
    %v35 = vld [vmem:[%s1 + $0x20] sm:$0xff]
    %v36 = vld [vmem:[%s1 + $0x28] sm:$0xff]
    %v37 = vld [vmem:[%s1 + $0x30] sm:$0xff]
    %v38 = vld [vmem:[%s1 + $0x38] sm:$0xff]
    %v39 = vld [vmem:[%s1 + $0x40] sm:$0xff]
    %v40 = vld [vmem:[%s1 + $0x48] sm:$0xff]
    %v41 = vld [vmem:[%s1 + $0x50] sm:$0xff]
    %v42 = vld [vmem:[%s1 + $0x58] sm:$0xff]
    %v43 = vld [vmem:[%s1 + $0x60] sm:$0xff]
    %v44 = vld [vmem:[%s1 + $0x68] sm:$0xff]
    %v45 = vld [vmem:[%s1 + $0x70] sm:$0xff]
    %v46 = vld [vmem:[%s1 + $0x78] sm:$0xff]
    %v47 = vsub.f32 %v15, %v31
    %v48 = vsub.f32 %v16, %v32
    %v49 = vsub.f32 %v17, %v33
    %v50 = vsub.f32 %v18, %v34
    %v51 = vsub.f32 %v19, %v35
    %v52 = vsub.f32 %v20, %v36
    %v53 = vsub.f32 %v21, %v37
    %v54 = vsub.f32 %v22, %v38
    %v55 = vsub.f32 %v23, %v39
    %v56 = vsub.f32 %v24, %v40
    %v57 = vsub.f32 %v25, %v41
    %v58 = vsub.f32 %v26, %v42
    %v59 = vsub.f32 %v27, %v43
    %v60 = vsub.f32 %v28, %v44
    %v61 = vsub.f32 %v29, %v45
    %v62 = vsub.f32 %v30, %v46
    %v63 = vadd.f32 %v47, 1e-06
    %v64 = vadd.f32 %v48, 1e-06
    %v65 = vadd.f32 %v49, 1e-06
    %v66 = vadd.f32 %v50, 1e-06
    %v67 = vadd.f32 %v51, 1e-06
    %v68 = vadd.f32 %v52, 1e-06
    %v69 = vadd.f32 %v53, 1e-06
    %v70 = vadd.f32 %v54, 1e-06
    %v71 = vadd.f32 %v55, 1e-06
    %v72 = vadd.f32 %v56, 1e-06
    %v73 = vadd.f32 %v57, 1e-06
    %v74 = vadd.f32 %v58, 1e-06
    %v75 = vadd.f32 %v59, 1e-06
    %v76 = vadd.f32 %v60, 1e-06
    %v77 = vadd.f32 %v61, 1e-06
    %v78 = vadd.f32 %v62, 1e-06
    %v79 = vmul.f32 %v63, %v63
    %v80 = vmul.f32 %v64, %v64
    %v81 = vmul.f32 %v65, %v65
    %v82 = vmul.f32 %v66, %v66
    %v83 = vmul.f32 %v67, %v67
    %v84 = vmul.f32 %v68, %v68
    %v85 = vmul.f32 %v69, %v69
    %v86 = vmul.f32 %v70, %v70
    %v87 = vmul.f32 %v71, %v71
    %v88 = vmul.f32 %v72, %v72
    %v89 = vmul.f32 %v73, %v73
    %v90 = vmul.f32 %v74, %v74
    %v91 = vmul.f32 %v75, %v75
    %v92 = vmul.f32 %v76, %v76
    %v93 = vmul.f32 %v77, %v77
    %v94 = vmul.f32 %v78, %v78
    %vm95 = vcmask 261120
    %v96 = vsel %vm95, %v79, 0.0
    %97 = vadd.xlane.f32.xlu0 %v96
    %v98 = vpop.xlane.xlu0 %97
    %v99 = vsel %vm95, %v80, 0.0
    %100 = vadd.xlane.f32.xlu0 %v99
    %v101 = vpop.xlane.xlu0 %100
    %v102 = vsel %vm95, %v81, 0.0
    %103 = vadd.xlane.f32.xlu0 %v102
    %v104 = vpop.xlane.xlu0 %103
    %v105 = vsel %vm95, %v82, 0.0
    %106 = vadd.xlane.f32.xlu0 %v105
    %v107 = vpop.xlane.xlu0 %106
    %v108 = vsel %vm95, %v83, 0.0
    %109 = vadd.xlane.f32.xlu0 %v108
    %v110 = vpop.xlane.xlu0 %109
    %v111 = vsel %vm95, %v84, 0.0
    %112 = vadd.xlane.f32.xlu0 %v111
    %v113 = vpop.xlane.xlu0 %112
    %v114 = vsel %vm95, %v85, 0.0
    %115 = vadd.xlane.f32.xlu0 %v114
    %v116 = vpop.xlane.xlu0 %115
    %v117 = vsel %vm95, %v86, 0.0
    %118 = vadd.xlane.f32.xlu0 %v117
    %v119 = vpop.xlane.xlu0 %118
    %v120 = vsel %vm95, %v87, 0.0
    %121 = vadd.xlane.f32.xlu0 %v120
    %v122 = vpop.xlane.xlu0 %121
    %v123 = vsel %vm95, %v88, 0.0
    %124 = vadd.xlane.f32.xlu0 %v123
    %v125 = vpop.xlane.xlu0 %124
    %v126 = vsel %vm95, %v89, 0.0
    %127 = vadd.xlane.f32.xlu0 %v126
    %v128 = vpop.xlane.xlu0 %127
    %v129 = vsel %vm95, %v90, 0.0
    %130 = vadd.xlane.f32.xlu0 %v129
    %v131 = vpop.xlane.xlu0 %130
    %v132 = vsel %vm95, %v91, 0.0
    %133 = vadd.xlane.f32.xlu0 %v132
    %v134 = vpop.xlane.xlu0 %133
    %v135 = vsel %vm95, %v92, 0.0
    %136 = vadd.xlane.f32.xlu0 %v135
    %v137 = vpop.xlane.xlu0 %136
    %v138 = vsel %vm95, %v93, 0.0
    %139 = vadd.xlane.f32.xlu0 %v138
    %v140 = vpop.xlane.xlu0 %139
    %v141 = vsel %vm95, %v94, 0.0
    %142 = vadd.xlane.f32.xlu0 %v141
    %v143 = vpop.xlane.xlu0 %142
    %v144 = vrsqrt.pop %v98
    %v145 = vmul.f32 %v144, %v98
    %v146 = vmul.f32 %v145, %v144
    %v147 = vmul.f32 0.5, %v146
    %v148 = vsub.f32 1.5, %v147
    %v149 = vmul.f32 %v144, %v148
    %v150 = vmul.f32 %v98, %v149
    %vm151 = vcmp.eq.f32.partialorder %v98, inf
    %v152 = vsel %vm151, %v98, %v150
    %vm153 = vcmp.eq.f32.partialorder %v98, 0.0
    %v154 = vand.u32 %v98, 2147483648
    %v155 = vsel %vm153, %v154, %v152
    %v156 = vrsqrt.pop %v101
    %v157 = vmul.f32 %v156, %v101
    %v158 = vmul.f32 %v157, %v156
    %v159 = vmul.f32 0.5, %v158
    %v160 = vsub.f32 1.5, %v159
    %v161 = vmul.f32 %v156, %v160
    %v162 = vmul.f32 %v101, %v161
    %vm163 = vcmp.eq.f32.partialorder %v101, inf
    %v164 = vsel %vm163, %v101, %v162
    %vm165 = vcmp.eq.f32.partialorder %v101, 0.0
    %v166 = vand.u32 %v101, 2147483648
    %v167 = vsel %vm165, %v166, %v164
    %v168 = vrsqrt.pop %v104
    %v169 = vmul.f32 %v168, %v104
    %v170 = vmul.f32 %v169, %v168
    %v171 = vmul.f32 0.5, %v170
    %v172 = vsub.f32 1.5, %v171
    %v173 = vmul.f32 %v168, %v172
    %v174 = vmul.f32 %v104, %v173
    %vm175 = vcmp.eq.f32.partialorder %v104, inf
    %v176 = vsel %vm175, %v104, %v174
    %vm177 = vcmp.eq.f32.partialorder %v104, 0.0
    %v178 = vand.u32 %v104, 2147483648
    %v179 = vsel %vm177, %v178, %v176
    %v180 = vrsqrt.pop %v107
    %v181 = vmul.f32 %v180, %v107
    %v182 = vmul.f32 %v181, %v180
    %v183 = vmul.f32 0.5, %v182
    %v184 = vsub.f32 1.5, %v183
    %v185 = vmul.f32 %v180, %v184
    %v186 = vmul.f32 %v107, %v185
    %vm187 = vcmp.eq.f32.partialorder %v107, inf
    %v188 = vsel %vm187, %v107, %v186
    %vm189 = vcmp.eq.f32.partialorder %v107, 0.0
    %v190 = vand.u32 %v107, 2147483648
    %v191 = vsel %vm189, %v190, %v188
    %v192 = vrsqrt.pop %v110
    %v193 = vmul.f32 %v192, %v110
    %v194 = vmul.f32 %v193, %v192
    %v195 = vmul.f32 0.5, %v194
    %v196 = vsub.f32 1.5, %v195
    %v197 = vmul.f32 %v192, %v196
    %v198 = vmul.f32 %v110, %v197
    %vm199 = vcmp.eq.f32.partialorder %v110, inf
    %v200 = vsel %vm199, %v110, %v198
    %vm201 = vcmp.eq.f32.partialorder %v110, 0.0
    %v202 = vand.u32 %v110, 2147483648
    %v203 = vsel %vm201, %v202, %v200
    %v204 = vrsqrt.pop %v113
    %v205 = vmul.f32 %v204, %v113
    %v206 = vmul.f32 %v205, %v204
    %v207 = vmul.f32 0.5, %v206
    %v208 = vsub.f32 1.5, %v207
    %v209 = vmul.f32 %v204, %v208
    %v210 = vmul.f32 %v113, %v209
    %vm211 = vcmp.eq.f32.partialorder %v113, inf
    %v212 = vsel %vm211, %v113, %v210
    %vm213 = vcmp.eq.f32.partialorder %v113, 0.0
    %v214 = vand.u32 %v113, 2147483648
    %v215 = vsel %vm213, %v214, %v212
    %v216 = vrsqrt.pop %v116
    %v217 = vmul.f32 %v216, %v116
    %v218 = vmul.f32 %v217, %v216
    %v219 = vmul.f32 0.5, %v218
    %v220 = vsub.f32 1.5, %v219
    %v221 = vmul.f32 %v216, %v220
    %v222 = vmul.f32 %v116, %v221
    %vm223 = vcmp.eq.f32.partialorder %v116, inf
    %v224 = vsel %vm223, %v116, %v222
    %vm225 = vcmp.eq.f32.partialorder %v116, 0.0
    %v226 = vand.u32 %v116, 2147483648
    %v227 = vsel %vm225, %v226, %v224
    %v228 = vrsqrt.pop %v119
    %v229 = vmul.f32 %v228, %v119
    %v230 = vmul.f32 %v229, %v228
    %v231 = vmul.f32 0.5, %v230
    %v232 = vsub.f32 1.5, %v231
    %v233 = vmul.f32 %v228, %v232
    %v234 = vmul.f32 %v119, %v233
    %vm235 = vcmp.eq.f32.partialorder %v119, inf
    %v236 = vsel %vm235, %v119, %v234
    %vm237 = vcmp.eq.f32.partialorder %v119, 0.0
    %v238 = vand.u32 %v119, 2147483648
    %v239 = vsel %vm237, %v238, %v236
    %v240 = vrsqrt.pop %v122
    %v241 = vmul.f32 %v240, %v122
    %v242 = vmul.f32 %v241, %v240
    %v243 = vmul.f32 0.5, %v242
    %v244 = vsub.f32 1.5, %v243
    %v245 = vmul.f32 %v240, %v244
    %v246 = vmul.f32 %v122, %v245
    %vm247 = vcmp.eq.f32.partialorder %v122, inf
    %v248 = vsel %vm247, %v122, %v246
    %vm249 = vcmp.eq.f32.partialorder %v122, 0.0
    %v250 = vand.u32 %v122, 2147483648
    %v251 = vsel %vm249, %v250, %v248
    %v252 = vrsqrt.pop %v125
    %v253 = vmul.f32 %v252, %v125
    %v254 = vmul.f32 %v253, %v252
    %v255 = vmul.f32 0.5, %v254
    %v256 = vsub.f32 1.5, %v255
    %v257 = vmul.f32 %v252, %v256
    %v258 = vmul.f32 %v125, %v257
    %vm259 = vcmp.eq.f32.partialorder %v125, inf
    %v260 = vsel %vm259, %v125, %v258
    %vm261 = vcmp.eq.f32.partialorder %v125, 0.0
    %v262 = vand.u32 %v125, 2147483648
    %v263 = vsel %vm261, %v262, %v260
    %v264 = vrsqrt.pop %v128
    %v265 = vmul.f32 %v264, %v128
    %v266 = vmul.f32 %v265, %v264
    %v267 = vmul.f32 0.5, %v266
    %v268 = vsub.f32 1.5, %v267
    %v269 = vmul.f32 %v264, %v268
    %v270 = vmul.f32 %v128, %v269
    %vm271 = vcmp.eq.f32.partialorder %v128, inf
    %v272 = vsel %vm271, %v128, %v270
    %vm273 = vcmp.eq.f32.partialorder %v128, 0.0
    %v274 = vand.u32 %v128, 2147483648
    %v275 = vsel %vm273, %v274, %v272
    %v276 = vrsqrt.pop %v131
    %v277 = vmul.f32 %v276, %v131
    %v278 = vmul.f32 %v277, %v276
    %v279 = vmul.f32 0.5, %v278
    %v280 = vsub.f32 1.5, %v279
    %v281 = vmul.f32 %v276, %v280
    %v282 = vmul.f32 %v131, %v281
    %vm283 = vcmp.eq.f32.partialorder %v131, inf
    %v284 = vsel %vm283, %v131, %v282
    %vm285 = vcmp.eq.f32.partialorder %v131, 0.0
    %v286 = vand.u32 %v131, 2147483648
    %v287 = vsel %vm285, %v286, %v284
    %v288 = vrsqrt.pop %v134
    %v289 = vmul.f32 %v288, %v134
    %v290 = vmul.f32 %v289, %v288
    %v291 = vmul.f32 0.5, %v290
    %v292 = vsub.f32 1.5, %v291
    %v293 = vmul.f32 %v288, %v292
    %v294 = vmul.f32 %v134, %v293
    %vm295 = vcmp.eq.f32.partialorder %v134, inf
    %v296 = vsel %vm295, %v134, %v294
    %vm297 = vcmp.eq.f32.partialorder %v134, 0.0
    %v298 = vand.u32 %v134, 2147483648
    %v299 = vsel %vm297, %v298, %v296
    %v300 = vrsqrt.pop %v137
    %v301 = vmul.f32 %v300, %v137
    %v302 = vmul.f32 %v301, %v300
    %v303 = vmul.f32 0.5, %v302
    %v304 = vsub.f32 1.5, %v303
    %v305 = vmul.f32 %v300, %v304
    %v306 = vmul.f32 %v137, %v305
    %vm307 = vcmp.eq.f32.partialorder %v137, inf
    %v308 = vsel %vm307, %v137, %v306
    %vm309 = vcmp.eq.f32.partialorder %v137, 0.0
    %v310 = vand.u32 %v137, 2147483648
    %v311 = vsel %vm309, %v310, %v308
    %v312 = vrsqrt.pop %v140
    %v313 = vmul.f32 %v312, %v140
    %v314 = vmul.f32 %v313, %v312
    %v315 = vmul.f32 0.5, %v314
    %v316 = vsub.f32 1.5, %v315
    %v317 = vmul.f32 %v312, %v316
    %v318 = vmul.f32 %v140, %v317
    %vm319 = vcmp.eq.f32.partialorder %v140, inf
    %v320 = vsel %vm319, %v140, %v318
    %vm321 = vcmp.eq.f32.partialorder %v140, 0.0
    %v322 = vand.u32 %v140, 2147483648
    %v323 = vsel %vm321, %v322, %v320
    %v324 = vrsqrt.pop %v143
    %v325 = vmul.f32 %v324, %v143
    %v326 = vmul.f32 %v325, %v324
    %v327 = vmul.f32 0.5, %v326
    %v328 = vsub.f32 1.5, %v327
    %v329 = vmul.f32 %v324, %v328
    %v330 = vmul.f32 %v143, %v329
    %vm331 = vcmp.eq.f32.partialorder %v143, inf
    %v332 = vsel %vm331, %v143, %v330
    %vm333 = vcmp.eq.f32.partialorder %v143, 0.0
    %v334 = vand.u32 %v143, 2147483648
    %v335 = vsel %vm333, %v334, %v332
    %v336 = vsub.f32 2.0, %v155
    %v337 = vsub.f32 2.0, %v167
    %v338 = vsub.f32 2.0, %v179
    %v339 = vsub.f32 2.0, %v191
    %v340 = vsub.f32 2.0, %v203
    %v341 = vsub.f32 2.0, %v215
    %v342 = vsub.f32 2.0, %v227
    %v343 = vsub.f32 2.0, %v239
    %v344 = vsub.f32 2.0, %v251
    %v345 = vsub.f32 2.0, %v263
    %v346 = vsub.f32 2.0, %v275
    %v347 = vsub.f32 2.0, %v287
    %v348 = vsub.f32 2.0, %v299
    %v349 = vsub.f32 2.0, %v311
    %v350 = vsub.f32 2.0, %v323
    %v351 = vsub.f32 2.0, %v335
    %v352 = vmax.f32 %v336, 0.0
    %v353 = vmax.f32 %v337, 0.0
    %v354 = vmax.f32 %v338, 0.0
    %v355 = vmax.f32 %v339, 0.0
    %v356 = vmax.f32 %v340, 0.0
    %v357 = vmax.f32 %v341, 0.0
    %v358 = vmax.f32 %v342, 0.0
    %v359 = vmax.f32 %v343, 0.0
    %v360 = vmax.f32 %v344, 0.0
    %v361 = vmax.f32 %v345, 0.0
    %v362 = vmax.f32 %v346, 0.0
    %v363 = vmax.f32 %v347, 0.0
    %v364 = vmax.f32 %v348, 0.0
    %v365 = vmax.f32 %v349, 0.0
    %v366 = vmax.f32 %v350, 0.0
    %v367 = vmax.f32 %v351, 0.0
    %v368 = vld [vmem:[%s2] sm:$0x1]
    %v369 = vsub.f32 1.0, %v368
    %v386 = vperm.slane %v98, 0
    %v387 = vperm.slane %v98, 1
    %v388 = vperm.slane %v98, 2
    %v389 = vperm.slane %v98, 3
    %v390 = vperm.slane %v98, 4
    %v391 = vperm.slane %v98, 5
    %v392 = vperm.slane %v98, 6
    %v393 = vperm.slane %v98, 7
    %v394 = vperm.slane %v101, 0
    %v395 = vperm.slane %v101, 1
    %v396 = vperm.slane %v101, 2
    %v397 = vperm.slane %v101, 3
    %v398 = vperm.slane %v101, 4
    %v399 = vperm.slane %v101, 5
    %v400 = vperm.slane %v101, 6
    %v401 = vperm.slane %v101, 7
    %v402 = vperm.slane %v104, 0
    %v403 = vperm.slane %v104, 1
    %v404 = vperm.slane %v104, 2
    %v405 = vperm.slane %v104, 3
    %v406 = vperm.slane %v104, 4
    %v407 = vperm.slane %v104, 5
    %v408 = vperm.slane %v104, 6
    %v409 = vperm.slane %v104, 7
    %v410 = vperm.slane %v107, 0
    %v411 = vperm.slane %v107, 1
    %v412 = vperm.slane %v107, 2
    %v413 = vperm.slane %v107, 3
    %v414 = vperm.slane %v107, 4
    %v415 = vperm.slane %v107, 5
    %v416 = vperm.slane %v107, 6
    %v417 = vperm.slane %v107, 7
    %v418 = vperm.slane %v110, 0
    %v419 = vperm.slane %v110, 1
    %v420 = vperm.slane %v110, 2
    %v421 = vperm.slane %v110, 3
    %v422 = vperm.slane %v110, 4
    %v423 = vperm.slane %v110, 5
    %v424 = vperm.slane %v110, 6
    %v425 = vperm.slane %v110, 7
    %v426 = vperm.slane %v113, 0
    %v427 = vperm.slane %v113, 1
    %v428 = vperm.slane %v113, 2
    %v429 = vperm.slane %v113, 3
    %v430 = vperm.slane %v113, 4
    %v431 = vperm.slane %v113, 5
    %v432 = vperm.slane %v113, 6
    %v433 = vperm.slane %v113, 7
    %v434 = vperm.slane %v116, 0
    %v435 = vperm.slane %v116, 1
    %v436 = vperm.slane %v116, 2
    %v437 = vperm.slane %v116, 3
    %v438 = vperm.slane %v116, 4
    %v439 = vperm.slane %v116, 5
    %v440 = vperm.slane %v116, 6
    %v441 = vperm.slane %v116, 7
    %v442 = vperm.slane %v119, 0
    %v443 = vperm.slane %v119, 1
    %v444 = vperm.slane %v119, 2
    %v445 = vperm.slane %v119, 3
    %v446 = vperm.slane %v119, 4
    %v447 = vperm.slane %v119, 5
    %v448 = vperm.slane %v119, 6
    %v449 = vperm.slane %v119, 7
    %v450 = vperm.slane %v122, 0
    %v451 = vperm.slane %v122, 1
    %v452 = vperm.slane %v122, 2
    %v453 = vperm.slane %v122, 3
    %v454 = vperm.slane %v122, 4
    %v455 = vperm.slane %v122, 5
    %v456 = vperm.slane %v122, 6
    %v457 = vperm.slane %v122, 7
    %v458 = vperm.slane %v125, 0
    %v459 = vperm.slane %v125, 1
    %v460 = vperm.slane %v125, 2
    %v461 = vperm.slane %v125, 3
    %v462 = vperm.slane %v125, 4
    %v463 = vperm.slane %v125, 5
    %v464 = vperm.slane %v125, 6
    %v465 = vperm.slane %v125, 7
    %v466 = vperm.slane %v128, 0
    %v467 = vperm.slane %v128, 1
    %v468 = vperm.slane %v128, 2
    %v469 = vperm.slane %v128, 3
    %v470 = vperm.slane %v128, 4
    %v471 = vperm.slane %v128, 5
    %v472 = vperm.slane %v128, 6
    %v473 = vperm.slane %v128, 7
    %v474 = vperm.slane %v131, 0
    %v475 = vperm.slane %v131, 1
    %v476 = vperm.slane %v131, 2
    %v477 = vperm.slane %v131, 3
    %v478 = vperm.slane %v131, 4
    %v479 = vperm.slane %v131, 5
    %v480 = vperm.slane %v131, 6
    %v481 = vperm.slane %v131, 7
    %v482 = vperm.slane %v134, 0
    %v483 = vperm.slane %v134, 1
    %v484 = vperm.slane %v134, 2
    %v485 = vperm.slane %v134, 3
    %v486 = vperm.slane %v134, 4
    %v487 = vperm.slane %v134, 5
    %v488 = vperm.slane %v134, 6
    %v489 = vperm.slane %v134, 7
    %v490 = vperm.slane %v137, 0
    %v491 = vperm.slane %v137, 1
    %v492 = vperm.slane %v137, 2
    %v493 = vperm.slane %v137, 3
    %v494 = vperm.slane %v137, 4
    %v495 = vperm.slane %v137, 5
    %v496 = vperm.slane %v137, 6
    %v497 = vperm.slane %v137, 7
    %v498 = vperm.slane %v140, 0
    %v499 = vperm.slane %v140, 1
    %v500 = vperm.slane %v140, 2
    %v501 = vperm.slane %v140, 3
    %v502 = vperm.slane %v140, 4
    %v503 = vperm.slane %v140, 5
    %v504 = vperm.slane %v140, 6
    %v505 = vperm.slane %v140, 7
    %v506 = vperm.slane %v143, 0
    %v507 = vperm.slane %v143, 1
    %v508 = vperm.slane %v143, 2
    %v509 = vperm.slane %v143, 3
    %v510 = vperm.slane %v143, 4
    %v511 = vperm.slane %v143, 5
    %v512 = vperm.slane %v143, 6
    %v513 = vperm.slane %v143, 7
    %514 = vst [vmem:[#allocation1] ss:$9 sm:$0xff] %v386
    %s515 = scalar_lea.vmem [#allocation1], 1
    %516 = vst [vmem:[%s515] ss:$9 sm:$0xff] %v387
    %s517 = scalar_lea.vmem [#allocation1], 2
    %518 = vst [vmem:[%s517] ss:$9 sm:$0xff] %v388
    %s519 = scalar_lea.vmem [#allocation1], 3
    %520 = vst [vmem:[%s519] ss:$9 sm:$0xff] %v389
    %s521 = scalar_lea.vmem [#allocation1], 4
    %522 = vst [vmem:[%s521] ss:$9 sm:$0xff] %v390
    %s523 = scalar_lea.vmem [#allocation1], 5
    %524 = vst [vmem:[%s523] ss:$9 sm:$0xff] %v391
    %s525 = scalar_lea.vmem [#allocation1], 6
    %526 = vst [vmem:[%s525] ss:$9 sm:$0xff] %v392
    %s527 = scalar_lea.vmem [#allocation1], 7
    %528 = vst [vmem:[%s527] ss:$9 sm:$0xff] %v393
    %v529 = vld [vmem:[#allocation1] sm:$0xff]
    %530 = vst [vmem:[#allocation1] ss:$9 sm:$0xff] %v394
    %531 = vst [vmem:[%s515] ss:$9 sm:$0xff] %v395
    %532 = vst [vmem:[%s517] ss:$9 sm:$0xff] %v396
    %533 = vst [vmem:[%s519] ss:$9 sm:$0xff] %v397
    %534 = vst [vmem:[%s521] ss:$9 sm:$0xff] %v398
    %535 = vst [vmem:[%s523] ss:$9 sm:$0xff] %v399
    %536 = vst [vmem:[%s525] ss:$9 sm:$0xff] %v400
    %537 = vst [vmem:[%s527] ss:$9 sm:$0xff] %v401
    %v538 = vld [vmem:[#allocation1] sm:$0xff]
    %539 = vst [vmem:[#allocation1] ss:$9 sm:$0xff] %v402
    %540 = vst [vmem:[%s515] ss:$9 sm:$0xff] %v403
    %541 = vst [vmem:[%s517] ss:$9 sm:$0xff] %v404
    %542 = vst [vmem:[%s519] ss:$9 sm:$0xff] %v405
    %543 = vst [vmem:[%s521] ss:$9 sm:$0xff] %v406
    %544 = vst [vmem:[%s523] ss:$9 sm:$0xff] %v407
    %545 = vst [vmem:[%s525] ss:$9 sm:$0xff] %v408
    %546 = vst [vmem:[%s527] ss:$9 sm:$0xff] %v409
    %v547 = vld [vmem:[#allocation1] sm:$0xff]
    %548 = vst [vmem:[#allocation1] ss:$9 sm:$0xff] %v410
    %549 = vst [vmem:[%s515] ss:$9 sm:$0xff] %v411
    %550 = vst [vmem:[%s517] ss:$9 sm:$0xff] %v412
    %551 = vst [vmem:[%s519] ss:$9 sm:$0xff] %v413
    %552 = vst [vmem:[%s521] ss:$9 sm:$0xff] %v414
    %553 = vst [vmem:[%s523] ss:$9 sm:$0xff] %v415
    %554 = vst [vmem:[%s525] ss:$9 sm:$0xff] %v416
    %555 = vst [vmem:[%s527] ss:$9 sm:$0xff] %v417
    %v556 = vld [vmem:[#allocation1] sm:$0xff]
    %557 = vst [vmem:[#allocation1] ss:$9 sm:$0xff] %v418
    %558 = vst [vmem:[%s515] ss:$9 sm:$0xff] %v419
    %559 = vst [vmem:[%s517] ss:$9 sm:$0xff] %v420
    %560 = vst [vmem:[%s519] ss:$9 sm:$0xff] %v421
    %561 = vst [vmem:[%s521] ss:$9 sm:$0xff] %v422
    %562 = vst [vmem:[%s523] ss:$9 sm:$0xff] %v423
    %563 = vst [vmem:[%s525] ss:$9 sm:$0xff] %v424
    %564 = vst [vmem:[%s527] ss:$9 sm:$0xff] %v425
    %v565 = vld [vmem:[#allocation1] sm:$0xff]
    %566 = vst [vmem:[#allocation1] ss:$9 sm:$0xff] %v426
    %567 = vst [vmem:[%s515] ss:$9 sm:$0xff] %v427
    %568 = vst [vmem:[%s517] ss:$9 sm:$0xff] %v428
    %569 = vst [vmem:[%s519] ss:$9 sm:$0xff] %v429
    %570 = vst [vmem:[%s521] ss:$9 sm:$0xff] %v430
    %571 = vst [vmem:[%s523] ss:$9 sm:$0xff] %v431
    %572 = vst [vmem:[%s525] ss:$9 sm:$0xff] %v432
    %573 = vst [vmem:[%s527] ss:$9 sm:$0xff] %v433
    %v574 = vld [vmem:[#allocation1] sm:$0xff]
    %575 = vst [vmem:[#allocation1] ss:$9 sm:$0xff] %v434
    %576 = vst [vmem:[%s515] ss:$9 sm:$0xff] %v435
    %577 = vst [vmem:[%s517] ss:$9 sm:$0xff] %v436
    %578 = vst [vmem:[%s519] ss:$9 sm:$0xff] %v437
    %579 = vst [vmem:[%s521] ss:$9 sm:$0xff] %v438
    %580 = vst [vmem:[%s523] ss:$9 sm:$0xff] %v439
    %581 = vst [vmem:[%s525] ss:$9 sm:$0xff] %v440
    %582 = vst [vmem:[%s527] ss:$9 sm:$0xff] %v441
    %v583 = vld [vmem:[#allocation1] sm:$0xff]
    %584 = vst [vmem:[#allocation1] ss:$9 sm:$0xff] %v442
    %585 = vst [vmem:[%s515] ss:$9 sm:$0xff] %v443
    %586 = vst [vmem:[%s517] ss:$9 sm:$0xff] %v444
    %587 = vst [vmem:[%s519] ss:$9 sm:$0xff] %v445
    %588 = vst [vmem:[%s521] ss:$9 sm:$0xff] %v446
    %589 = vst [vmem:[%s523] ss:$9 sm:$0xff] %v447
    %590 = vst [vmem:[%s525] ss:$9 sm:$0xff] %v448
    %591 = vst [vmem:[%s527] ss:$9 sm:$0xff] %v449
    %v592 = vld [vmem:[#allocation1] sm:$0xff]
    %593 = vst [vmem:[#allocation1] ss:$9 sm:$0xff] %v450
    %594 = vst [vmem:[%s515] ss:$9 sm:$0xff] %v451
    %595 = vst [vmem:[%s517] ss:$9 sm:$0xff] %v452
    %596 = vst [vmem:[%s519] ss:$9 sm:$0xff] %v453
    %597 = vst [vmem:[%s521] ss:$9 sm:$0xff] %v454
    %598 = vst [vmem:[%s523] ss:$9 sm:$0xff] %v455
    %599 = vst [vmem:[%s525] ss:$9 sm:$0xff] %v456
    %600 = vst [vmem:[%s527] ss:$9 sm:$0xff] %v457
    %v601 = vld [vmem:[#allocation1] sm:$0xff]
    %602 = vst [vmem:[#allocation1] ss:$9 sm:$0xff] %v458
    %603 = vst [vmem:[%s515] ss:$9 sm:$0xff] %v459
    %604 = vst [vmem:[%s517] ss:$9 sm:$0xff] %v460
    %605 = vst [vmem:[%s519] ss:$9 sm:$0xff] %v461
    %606 = vst [vmem:[%s521] ss:$9 sm:$0xff] %v462
    %607 = vst [vmem:[%s523] ss:$9 sm:$0xff] %v463
    %608 = vst [vmem:[%s525] ss:$9 sm:$0xff] %v464
    %609 = vst [vmem:[%s527] ss:$9 sm:$0xff] %v465
    %v610 = vld [vmem:[#allocation1] sm:$0xff]
    %611 = vst [vmem:[#allocation1] ss:$9 sm:$0xff] %v466
    %612 = vst [vmem:[%s515] ss:$9 sm:$0xff] %v467
    %613 = vst [vmem:[%s517] ss:$9 sm:$0xff] %v468
    %614 = vst [vmem:[%s519] ss:$9 sm:$0xff] %v469
    %615 = vst [vmem:[%s521] ss:$9 sm:$0xff] %v470
    %616 = vst [vmem:[%s523] ss:$9 sm:$0xff] %v471
    %617 = vst [vmem:[%s525] ss:$9 sm:$0xff] %v472
    %618 = vst [vmem:[%s527] ss:$9 sm:$0xff] %v473
    %v619 = vld [vmem:[#allocation1] sm:$0xff]
    %620 = vst [vmem:[#allocation1] ss:$9 sm:$0xff] %v474
    %621 = vst [vmem:[%s515] ss:$9 sm:$0xff] %v475
    %622 = vst [vmem:[%s517] ss:$9 sm:$0xff] %v476
    %623 = vst [vmem:[%s519] ss:$9 sm:$0xff] %v477
    %624 = vst [vmem:[%s521] ss:$9 sm:$0xff] %v478
    %625 = vst [vmem:[%s523] ss:$9 sm:$0xff] %v479
    %626 = vst [vmem:[%s525] ss:$9 sm:$0xff] %v480
    %627 = vst [vmem:[%s527] ss:$9 sm:$0xff] %v481
    %v628 = vld [vmem:[#allocation1] sm:$0xff]
    %629 = vst [vmem:[#allocation1] ss:$9 sm:$0xff] %v482
    %630 = vst [vmem:[%s515] ss:$9 sm:$0xff] %v483
    %631 = vst [vmem:[%s517] ss:$9 sm:$0xff] %v484
    %632 = vst [vmem:[%s519] ss:$9 sm:$0xff] %v485
    %633 = vst [vmem:[%s521] ss:$9 sm:$0xff] %v486
    %634 = vst [vmem:[%s523] ss:$9 sm:$0xff] %v487
    %635 = vst [vmem:[%s525] ss:$9 sm:$0xff] %v488
    %636 = vst [vmem:[%s527] ss:$9 sm:$0xff] %v489
    %v637 = vld [vmem:[#allocation1] sm:$0xff]
    %638 = vst [vmem:[#allocation1] ss:$9 sm:$0xff] %v490
    %639 = vst [vmem:[%s515] ss:$9 sm:$0xff] %v491
    %640 = vst [vmem:[%s517] ss:$9 sm:$0xff] %v492
    %641 = vst [vmem:[%s519] ss:$9 sm:$0xff] %v493
    %642 = vst [vmem:[%s521] ss:$9 sm:$0xff] %v494
    %643 = vst [vmem:[%s523] ss:$9 sm:$0xff] %v495
    %644 = vst [vmem:[%s525] ss:$9 sm:$0xff] %v496
    %645 = vst [vmem:[%s527] ss:$9 sm:$0xff] %v497
    %v646 = vld [vmem:[#allocation1] sm:$0xff]
    %647 = vst [vmem:[#allocation1] ss:$9 sm:$0xff] %v498
    %648 = vst [vmem:[%s515] ss:$9 sm:$0xff] %v499
    %649 = vst [vmem:[%s517] ss:$9 sm:$0xff] %v500
    %650 = vst [vmem:[%s519] ss:$9 sm:$0xff] %v501
    %651 = vst [vmem:[%s521] ss:$9 sm:$0xff] %v502
    %652 = vst [vmem:[%s523] ss:$9 sm:$0xff] %v503
    %653 = vst [vmem:[%s525] ss:$9 sm:$0xff] %v504
    %654 = vst [vmem:[%s527] ss:$9 sm:$0xff] %v505
    %v655 = vld [vmem:[#allocation1] sm:$0xff]
    %656 = vst [vmem:[#allocation1] ss:$9 sm:$0xff] %v506
    %657 = vst [vmem:[%s515] ss:$9 sm:$0xff] %v507
    %658 = vst [vmem:[%s517] ss:$9 sm:$0xff] %v508
    %659 = vst [vmem:[%s519] ss:$9 sm:$0xff] %v509
    %660 = vst [vmem:[%s521] ss:$9 sm:$0xff] %v510
    %661 = vst [vmem:[%s523] ss:$9 sm:$0xff] %v511
    %662 = vst [vmem:[%s525] ss:$9 sm:$0xff] %v512
    %663 = vst [vmem:[%s527] ss:$9 sm:$0xff] %v513
    %v664 = vld [vmem:[#allocation1] sm:$0xff]
    %665 = vset.pattern.permute.xlu0 0
    %666 = vperm.xlu0 %665, %v529
    %v667 = vpop.permute.xlu0 %666
    %668 = vset.pattern.permute.xlu0 0
    %669 = vperm.xlu0 %668, %v538
    %v670 = vpop.permute.xlu0 %669
    %671 = vset.pattern.permute.xlu0 0
    %672 = vperm.xlu0 %671, %v547
    %v673 = vpop.permute.xlu0 %672
    %674 = vset.pattern.permute.xlu0 0
    %675 = vperm.xlu0 %674, %v556
    %v676 = vpop.permute.xlu0 %675
    %677 = vset.pattern.permute.xlu0 0
    %678 = vperm.xlu0 %677, %v565
    %v679 = vpop.permute.xlu0 %678
    %680 = vset.pattern.permute.xlu0 0
    %681 = vperm.xlu0 %680, %v574
    %v682 = vpop.permute.xlu0 %681
    %683 = vset.pattern.permute.xlu0 0
    %684 = vperm.xlu0 %683, %v583
    %v685 = vpop.permute.xlu0 %684
    %686 = vset.pattern.permute.xlu0 0
    %687 = vperm.xlu0 %686, %v592
    %v688 = vpop.permute.xlu0 %687
    %689 = vset.pattern.permute.xlu0 0
    %690 = vperm.xlu0 %689, %v601
    %v691 = vpop.permute.xlu0 %690
    %692 = vset.pattern.permute.xlu0 0
    %693 = vperm.xlu0 %692, %v610
    %v694 = vpop.permute.xlu0 %693
    %695 = vset.pattern.permute.xlu0 0
    %696 = vperm.xlu0 %695, %v619
    %v697 = vpop.permute.xlu0 %696
    %698 = vset.pattern.permute.xlu0 0
    %699 = vperm.xlu0 %698, %v628
    %v700 = vpop.permute.xlu0 %699
    %701 = vset.pattern.permute.xlu0 0
    %702 = vperm.xlu0 %701, %v637
    %v703 = vpop.permute.xlu0 %702
    %704 = vset.pattern.permute.xlu0 0
    %705 = vperm.xlu0 %704, %v646
    %v706 = vpop.permute.xlu0 %705
    %707 = vset.pattern.permute.xlu0 0
    %708 = vperm.xlu0 %707, %v655
    %v709 = vpop.permute.xlu0 %708
    %710 = vset.pattern.permute.xlu0 0
    %711 = vperm.xlu0 %710, %v664
    %v712 = vpop.permute.xlu0 %711
    %v713 = vlaneseq
    %v714 = vand.u32 %v713, 127
    %v715 = vperm.slane %v667, %v714
    %v716 = vadd.s32 %v714, 4294967288
    %v717 = vperm.slane %v670, %v716
    %vm718 = vcmask 130112
    %v719 = vsel %vm718, %v717, %v715
    %v720 = vadd.s32 %v714, 4294967280
    %v721 = vperm.slane %v673, %v720
    %vm722 = vcmask 195712
    %v723 = vsel %vm722, %v721, %v719
    %v724 = vadd.s32 %v714, 4294967272
    %v725 = vperm.slane %v676, %v724
    %vm726 = vcmask 261312
    %v727 = vsel %vm726, %v725, %v723
    %v728 = vadd.s32 %v714, 4294967264
    %v729 = vperm.slane %v679, %v728
    %vm730 = vcmask 326912
    %v731 = vsel %vm730, %v729, %v727
    %v732 = vadd.s32 %v714, 4294967256
    %v733 = vperm.slane %v682, %v732
    %vm734 = vcmask 392512
    %v735 = vsel %vm734, %v733, %v731
    %v736 = vadd.s32 %v714, 4294967248
    %v737 = vperm.slane %v685, %v736
    %vm738 = vcmask 458112
    %v739 = vsel %vm738, %v737, %v735
    %v740 = vadd.s32 %v714, 4294967240
    %v741 = vperm.slane %v688, %v740
    %vm742 = vcmask 523712
    %v743 = vsel %vm742, %v741, %v739
    %v744 = vadd.s32 %v714, 4294967232
    %v745 = vperm.slane %v691, %v744
    %vm746 = vcmask 589312
    %v747 = vsel %vm746, %v745, %v743
    %v748 = vadd.s32 %v714, 4294967224
    %v749 = vperm.slane %v694, %v748
    %vm750 = vcmask 654912
    %v751 = vsel %vm750, %v749, %v747
    %v752 = vadd.s32 %v714, 4294967216
    %v753 = vperm.slane %v697, %v752
    %vm754 = vcmask 720512
    %v755 = vsel %vm754, %v753, %v751
    %v756 = vadd.s32 %v714, 4294967208
    %v757 = vperm.slane %v700, %v756
    %vm758 = vcmask 786112
    %v759 = vsel %vm758, %v757, %v755
    %v760 = vadd.s32 %v714, 4294967200
    %v761 = vperm.slane %v703, %v760
    %vm762 = vcmask 851712
    %v763 = vsel %vm762, %v761, %v759
    %v764 = vadd.s32 %v714, 4294967192
    %v765 = vperm.slane %v706, %v764
    %vm766 = vcmask 917312
    %v767 = vsel %vm766, %v765, %v763
    %v768 = vadd.s32 %v714, 4294967184
    %v769 = vperm.slane %v709, %v768
    %vm770 = vcmask 982912
    %v771 = vsel %vm770, %v769, %v767
    %v772 = vadd.s32 %v714, 4294967176
    %v773 = vperm.slane %v712, %v772
    %vm774 = vcmask 1048512
    %v775 = vsel %vm774, %v773, %v771
    %v777 = vmul.f32 %v369, %v775
    %v778 = vmul.f32 %v352, %v352
    %v779 = vmul.f32 %v353, %v353
    %v780 = vmul.f32 %v354, %v354
    %v781 = vmul.f32 %v355, %v355
    %v782 = vmul.f32 %v356, %v356
    %v783 = vmul.f32 %v357, %v357
    %v784 = vmul.f32 %v358, %v358
    %v785 = vmul.f32 %v359, %v359
    %v786 = vmul.f32 %v360, %v360
    %v787 = vmul.f32 %v361, %v361
    %v788 = vmul.f32 %v362, %v362
    %v789 = vmul.f32 %v363, %v363
    %v790 = vmul.f32 %v364, %v364
    %v791 = vmul.f32 %v365, %v365
    %v792 = vmul.f32 %v366, %v366
    %v793 = vmul.f32 %v367, %v367
    %v810 = vperm.slane %v778, 0
    %v811 = vperm.slane %v778, 1
    %v812 = vperm.slane %v778, 2
    %v813 = vperm.slane %v778, 3
    %v814 = vperm.slane %v778, 4
    %v815 = vperm.slane %v778, 5
    %v816 = vperm.slane %v778, 6
    %v817 = vperm.slane %v778, 7
    %v818 = vperm.slane %v779, 0
    %v819 = vperm.slane %v779, 1
    %v820 = vperm.slane %v779, 2
    %v821 = vperm.slane %v779, 3
    %v822 = vperm.slane %v779, 4
    %v823 = vperm.slane %v779, 5
    %v824 = vperm.slane %v779, 6
    %v825 = vperm.slane %v779, 7
    %v826 = vperm.slane %v780, 0
    %v827 = vperm.slane %v780, 1
    %v828 = vperm.slane %v780, 2
    %v829 = vperm.slane %v780, 3
    %v830 = vperm.slane %v780, 4
    %v831 = vperm.slane %v780, 5
    %v832 = vperm.slane %v780, 6
    %v833 = vperm.slane %v780, 7
    %v834 = vperm.slane %v781, 0
    %v835 = vperm.slane %v781, 1
    %v836 = vperm.slane %v781, 2
    %v837 = vperm.slane %v781, 3
    %v838 = vperm.slane %v781, 4
    %v839 = vperm.slane %v781, 5
    %v840 = vperm.slane %v781, 6
    %v841 = vperm.slane %v781, 7
    %v842 = vperm.slane %v782, 0
    %v843 = vperm.slane %v782, 1
    %v844 = vperm.slane %v782, 2
    %v845 = vperm.slane %v782, 3
    %v846 = vperm.slane %v782, 4
    %v847 = vperm.slane %v782, 5
    %v848 = vperm.slane %v782, 6
    %v849 = vperm.slane %v782, 7
    %v850 = vperm.slane %v783, 0
    %v851 = vperm.slane %v783, 1
    %v852 = vperm.slane %v783, 2
    %v853 = vperm.slane %v783, 3
    %v854 = vperm.slane %v783, 4
    %v855 = vperm.slane %v783, 5
    %v856 = vperm.slane %v783, 6
    %v857 = vperm.slane %v783, 7
    %v858 = vperm.slane %v784, 0
    %v859 = vperm.slane %v784, 1
    %v860 = vperm.slane %v784, 2
    %v861 = vperm.slane %v784, 3
    %v862 = vperm.slane %v784, 4
    %v863 = vperm.slane %v784, 5
    %v864 = vperm.slane %v784, 6
    %v865 = vperm.slane %v784, 7
    %v866 = vperm.slane %v785, 0
    %v867 = vperm.slane %v785, 1
    %v868 = vperm.slane %v785, 2
    %v869 = vperm.slane %v785, 3
    %v870 = vperm.slane %v785, 4
    %v871 = vperm.slane %v785, 5
    %v872 = vperm.slane %v785, 6
    %v873 = vperm.slane %v785, 7
    %v874 = vperm.slane %v786, 0
    %v875 = vperm.slane %v786, 1
    %v876 = vperm.slane %v786, 2
    %v877 = vperm.slane %v786, 3
    %v878 = vperm.slane %v786, 4
    %v879 = vperm.slane %v786, 5
    %v880 = vperm.slane %v786, 6
    %v881 = vperm.slane %v786, 7
    %v882 = vperm.slane %v787, 0
    %v883 = vperm.slane %v787, 1
    %v884 = vperm.slane %v787, 2
    %v885 = vperm.slane %v787, 3
    %v886 = vperm.slane %v787, 4
    %v887 = vperm.slane %v787, 5
    %v888 = vperm.slane %v787, 6
    %v889 = vperm.slane %v787, 7
    %v890 = vperm.slane %v788, 0
    %v891 = vperm.slane %v788, 1
    %v892 = vperm.slane %v788, 2
    %v893 = vperm.slane %v788, 3
    %v894 = vperm.slane %v788, 4
    %v895 = vperm.slane %v788, 5
    %v896 = vperm.slane %v788, 6
    %v897 = vperm.slane %v788, 7
    %v898 = vperm.slane %v789, 0
    %v899 = vperm.slane %v789, 1
    %v900 = vperm.slane %v789, 2
    %v901 = vperm.slane %v789, 3
    %v902 = vperm.slane %v789, 4
    %v903 = vperm.slane %v789, 5
    %v904 = vperm.slane %v789, 6
    %v905 = vperm.slane %v789, 7
    %v906 = vperm.slane %v790, 0
    %v907 = vperm.slane %v790, 1
    %v908 = vperm.slane %v790, 2
    %v909 = vperm.slane %v790, 3
    %v910 = vperm.slane %v790, 4
    %v911 = vperm.slane %v790, 5
    %v912 = vperm.slane %v790, 6
    %v913 = vperm.slane %v790, 7
    %v914 = vperm.slane %v791, 0
    %v915 = vperm.slane %v791, 1
    %v916 = vperm.slane %v791, 2
    %v917 = vperm.slane %v791, 3
    %v918 = vperm.slane %v791, 4
    %v919 = vperm.slane %v791, 5
    %v920 = vperm.slane %v791, 6
    %v921 = vperm.slane %v791, 7
    %v922 = vperm.slane %v792, 0
    %v923 = vperm.slane %v792, 1
    %v924 = vperm.slane %v792, 2
    %v925 = vperm.slane %v792, 3
    %v926 = vperm.slane %v792, 4
    %v927 = vperm.slane %v792, 5
    %v928 = vperm.slane %v792, 6
    %v929 = vperm.slane %v792, 7
    %v930 = vperm.slane %v793, 0
    %v931 = vperm.slane %v793, 1
    %v932 = vperm.slane %v793, 2
    %v933 = vperm.slane %v793, 3
    %v934 = vperm.slane %v793, 4
    %v935 = vperm.slane %v793, 5
    %v936 = vperm.slane %v793, 6
    %v937 = vperm.slane %v793, 7
    %938 = vst [vmem:[#allocation1] ss:$9 sm:$0xff] %v810
    %s939 = scalar_lea.vmem [#allocation1], 1
    %940 = vst [vmem:[%s939] ss:$9 sm:$0xff] %v811
    %s941 = scalar_lea.vmem [#allocation1], 2
    %942 = vst [vmem:[%s941] ss:$9 sm:$0xff] %v812
    %s943 = scalar_lea.vmem [#allocation1], 3
    %944 = vst [vmem:[%s943] ss:$9 sm:$0xff] %v813
    %s945 = scalar_lea.vmem [#allocation1], 4
    %946 = vst [vmem:[%s945] ss:$9 sm:$0xff] %v814
    %s947 = scalar_lea.vmem [#allocation1], 5
    %948 = vst [vmem:[%s947] ss:$9 sm:$0xff] %v815
    %s949 = scalar_lea.vmem [#allocation1], 6
    %950 = vst [vmem:[%s949] ss:$9 sm:$0xff] %v816
    %s951 = scalar_lea.vmem [#allocation1], 7
    %952 = vst [vmem:[%s951] ss:$9 sm:$0xff] %v817
    %v953 = vld [vmem:[#allocation1] sm:$0xff]
    %954 = vst [vmem:[#allocation1] ss:$9 sm:$0xff] %v818
    %955 = vst [vmem:[%s939] ss:$9 sm:$0xff] %v819
    %956 = vst [vmem:[%s941] ss:$9 sm:$0xff] %v820
    %957 = vst [vmem:[%s943] ss:$9 sm:$0xff] %v821
    %958 = vst [vmem:[%s945] ss:$9 sm:$0xff] %v822
    %959 = vst [vmem:[%s947] ss:$9 sm:$0xff] %v823
    %960 = vst [vmem:[%s949] ss:$9 sm:$0xff] %v824
    %961 = vst [vmem:[%s951] ss:$9 sm:$0xff] %v825
    %v962 = vld [vmem:[#allocation1] sm:$0xff]
    %963 = vst [vmem:[#allocation1] ss:$9 sm:$0xff] %v826
    %964 = vst [vmem:[%s939] ss:$9 sm:$0xff] %v827
    %965 = vst [vmem:[%s941] ss:$9 sm:$0xff] %v828
    %966 = vst [vmem:[%s943] ss:$9 sm:$0xff] %v829
    %967 = vst [vmem:[%s945] ss:$9 sm:$0xff] %v830
    %968 = vst [vmem:[%s947] ss:$9 sm:$0xff] %v831
    %969 = vst [vmem:[%s949] ss:$9 sm:$0xff] %v832
    %970 = vst [vmem:[%s951] ss:$9 sm:$0xff] %v833
    %v971 = vld [vmem:[#allocation1] sm:$0xff]
    %972 = vst [vmem:[#allocation1] ss:$9 sm:$0xff] %v834
    %973 = vst [vmem:[%s939] ss:$9 sm:$0xff] %v835
    %974 = vst [vmem:[%s941] ss:$9 sm:$0xff] %v836
    %975 = vst [vmem:[%s943] ss:$9 sm:$0xff] %v837
    %976 = vst [vmem:[%s945] ss:$9 sm:$0xff] %v838
    %977 = vst [vmem:[%s947] ss:$9 sm:$0xff] %v839
    %978 = vst [vmem:[%s949] ss:$9 sm:$0xff] %v840
    %979 = vst [vmem:[%s951] ss:$9 sm:$0xff] %v841
    %v980 = vld [vmem:[#allocation1] sm:$0xff]
    %981 = vst [vmem:[#allocation1] ss:$9 sm:$0xff] %v842
    %982 = vst [vmem:[%s939] ss:$9 sm:$0xff] %v843
    %983 = vst [vmem:[%s941] ss:$9 sm:$0xff] %v844
    %984 = vst [vmem:[%s943] ss:$9 sm:$0xff] %v845
    %985 = vst [vmem:[%s945] ss:$9 sm:$0xff] %v846
    %986 = vst [vmem:[%s947] ss:$9 sm:$0xff] %v847
    %987 = vst [vmem:[%s949] ss:$9 sm:$0xff] %v848
    %988 = vst [vmem:[%s951] ss:$9 sm:$0xff] %v849
    %v989 = vld [vmem:[#allocation1] sm:$0xff]
    %990 = vst [vmem:[#allocation1] ss:$9 sm:$0xff] %v850
    %991 = vst [vmem:[%s939] ss:$9 sm:$0xff] %v851
    %992 = vst [vmem:[%s941] ss:$9 sm:$0xff] %v852
    %993 = vst [vmem:[%s943] ss:$9 sm:$0xff] %v853
    %994 = vst [vmem:[%s945] ss:$9 sm:$0xff] %v854
    %995 = vst [vmem:[%s947] ss:$9 sm:$0xff] %v855
    %996 = vst [vmem:[%s949] ss:$9 sm:$0xff] %v856
    %997 = vst [vmem:[%s951] ss:$9 sm:$0xff] %v857
    %v998 = vld [vmem:[#allocation1] sm:$0xff]
    %999 = vst [vmem:[#allocation1] ss:$9 sm:$0xff] %v858
    %1000 = vst [vmem:[%s939] ss:$9 sm:$0xff] %v859
    %1001 = vst [vmem:[%s941] ss:$9 sm:$0xff] %v860
    %1002 = vst [vmem:[%s943] ss:$9 sm:$0xff] %v861
    %1003 = vst [vmem:[%s945] ss:$9 sm:$0xff] %v862
    %1004 = vst [vmem:[%s947] ss:$9 sm:$0xff] %v863
    %1005 = vst [vmem:[%s949] ss:$9 sm:$0xff] %v864
    %1006 = vst [vmem:[%s951] ss:$9 sm:$0xff] %v865
    %v1007 = vld [vmem:[#allocation1] sm:$0xff]
    %1008 = vst [vmem:[#allocation1] ss:$9 sm:$0xff] %v866
    %1009 = vst [vmem:[%s939] ss:$9 sm:$0xff] %v867
    %1010 = vst [vmem:[%s941] ss:$9 sm:$0xff] %v868
    %1011 = vst [vmem:[%s943] ss:$9 sm:$0xff] %v869
    %1012 = vst [vmem:[%s945] ss:$9 sm:$0xff] %v870
    %1013 = vst [vmem:[%s947] ss:$9 sm:$0xff] %v871
    %1014 = vst [vmem:[%s949] ss:$9 sm:$0xff] %v872
    %1015 = vst [vmem:[%s951] ss:$9 sm:$0xff] %v873
    %v1016 = vld [vmem:[#allocation1] sm:$0xff]
    %1017 = vst [vmem:[#allocation1] ss:$9 sm:$0xff] %v874
    %1018 = vst [vmem:[%s939] ss:$9 sm:$0xff] %v875
    %1019 = vst [vmem:[%s941] ss:$9 sm:$0xff] %v876
    %1020 = vst [vmem:[%s943] ss:$9 sm:$0xff] %v877
    %1021 = vst [vmem:[%s945] ss:$9 sm:$0xff] %v878
    %1022 = vst [vmem:[%s947] ss:$9 sm:$0xff] %v879
    %1023 = vst [vmem:[%s949] ss:$9 sm:$0xff] %v880
    %1024 = vst [vmem:[%s951] ss:$9 sm:$0xff] %v881
    %v1025 = vld [vmem:[#allocation1] sm:$0xff]
    %1026 = vst [vmem:[#allocation1] ss:$9 sm:$0xff] %v882
    %1027 = vst [vmem:[%s939] ss:$9 sm:$0xff] %v883
    %1028 = vst [vmem:[%s941] ss:$9 sm:$0xff] %v884
    %1029 = vst [vmem:[%s943] ss:$9 sm:$0xff] %v885
    %1030 = vst [vmem:[%s945] ss:$9 sm:$0xff] %v886
    %1031 = vst [vmem:[%s947] ss:$9 sm:$0xff] %v887
    %1032 = vst [vmem:[%s949] ss:$9 sm:$0xff] %v888
    %1033 = vst [vmem:[%s951] ss:$9 sm:$0xff] %v889
    %v1034 = vld [vmem:[#allocation1] sm:$0xff]
    %1035 = vst [vmem:[#allocation1] ss:$9 sm:$0xff] %v890
    %1036 = vst [vmem:[%s939] ss:$9 sm:$0xff] %v891
    %1037 = vst [vmem:[%s941] ss:$9 sm:$0xff] %v892
    %1038 = vst [vmem:[%s943] ss:$9 sm:$0xff] %v893
    %1039 = vst [vmem:[%s945] ss:$9 sm:$0xff] %v894
    %1040 = vst [vmem:[%s947] ss:$9 sm:$0xff] %v895
    %1041 = vst [vmem:[%s949] ss:$9 sm:$0xff] %v896
    %1042 = vst [vmem:[%s951] ss:$9 sm:$0xff] %v897
    %v1043 = vld [vmem:[#allocation1] sm:$0xff]
    %1044 = vst [vmem:[#allocation1] ss:$9 sm:$0xff] %v898
    %1045 = vst [vmem:[%s939] ss:$9 sm:$0xff] %v899
    %1046 = vst [vmem:[%s941] ss:$9 sm:$0xff] %v900
    %1047 = vst [vmem:[%s943] ss:$9 sm:$0xff] %v901
    %1048 = vst [vmem:[%s945] ss:$9 sm:$0xff] %v902
    %1049 = vst [vmem:[%s947] ss:$9 sm:$0xff] %v903
    %1050 = vst [vmem:[%s949] ss:$9 sm:$0xff] %v904
    %1051 = vst [vmem:[%s951] ss:$9 sm:$0xff] %v905
    %v1052 = vld [vmem:[#allocation1] sm:$0xff]
    %1053 = vst [vmem:[#allocation1] ss:$9 sm:$0xff] %v906
    %1054 = vst [vmem:[%s939] ss:$9 sm:$0xff] %v907
    %1055 = vst [vmem:[%s941] ss:$9 sm:$0xff] %v908
    %1056 = vst [vmem:[%s943] ss:$9 sm:$0xff] %v909
    %1057 = vst [vmem:[%s945] ss:$9 sm:$0xff] %v910
    %1058 = vst [vmem:[%s947] ss:$9 sm:$0xff] %v911
    %1059 = vst [vmem:[%s949] ss:$9 sm:$0xff] %v912
    %1060 = vst [vmem:[%s951] ss:$9 sm:$0xff] %v913
    %v1061 = vld [vmem:[#allocation1] sm:$0xff]
    %1062 = vst [vmem:[#allocation1] ss:$9 sm:$0xff] %v914
    %1063 = vst [vmem:[%s939] ss:$9 sm:$0xff] %v915
    %1064 = vst [vmem:[%s941] ss:$9 sm:$0xff] %v916
    %1065 = vst [vmem:[%s943] ss:$9 sm:$0xff] %v917
    %1066 = vst [vmem:[%s945] ss:$9 sm:$0xff] %v918
    %1067 = vst [vmem:[%s947] ss:$9 sm:$0xff] %v919
    %1068 = vst [vmem:[%s949] ss:$9 sm:$0xff] %v920
    %1069 = vst [vmem:[%s951] ss:$9 sm:$0xff] %v921
    %v1070 = vld [vmem:[#allocation1] sm:$0xff]
    %1071 = vst [vmem:[#allocation1] ss:$9 sm:$0xff] %v922
    %1072 = vst [vmem:[%s939] ss:$9 sm:$0xff] %v923
    %1073 = vst [vmem:[%s941] ss:$9 sm:$0xff] %v924
    %1074 = vst [vmem:[%s943] ss:$9 sm:$0xff] %v925
    %1075 = vst [vmem:[%s945] ss:$9 sm:$0xff] %v926
    %1076 = vst [vmem:[%s947] ss:$9 sm:$0xff] %v927
    %1077 = vst [vmem:[%s949] ss:$9 sm:$0xff] %v928
    %1078 = vst [vmem:[%s951] ss:$9 sm:$0xff] %v929
    %v1079 = vld [vmem:[#allocation1] sm:$0xff]
    %1080 = vst [vmem:[#allocation1] ss:$9 sm:$0xff] %v930
    %1081 = vst [vmem:[%s939] ss:$9 sm:$0xff] %v931
    %1082 = vst [vmem:[%s941] ss:$9 sm:$0xff] %v932
    %1083 = vst [vmem:[%s943] ss:$9 sm:$0xff] %v933
    %1084 = vst [vmem:[%s945] ss:$9 sm:$0xff] %v934
    %1085 = vst [vmem:[%s947] ss:$9 sm:$0xff] %v935
    %1086 = vst [vmem:[%s949] ss:$9 sm:$0xff] %v936
    %1087 = vst [vmem:[%s951] ss:$9 sm:$0xff] %v937
    %v1088 = vld [vmem:[#allocation1] sm:$0xff]
    %1089 = vset.pattern.permute.xlu0 0
    %1090 = vperm.xlu0 %1089, %v953
    %v1091 = vpop.permute.xlu0 %1090
    %1092 = vset.pattern.permute.xlu0 0
    %1093 = vperm.xlu0 %1092, %v962
    %v1094 = vpop.permute.xlu0 %1093
    %1095 = vset.pattern.permute.xlu0 0
    %1096 = vperm.xlu0 %1095, %v971
    %v1097 = vpop.permute.xlu0 %1096
    %1098 = vset.pattern.permute.xlu0 0
    %1099 = vperm.xlu0 %1098, %v980
    %v1100 = vpop.permute.xlu0 %1099
    %1101 = vset.pattern.permute.xlu0 0
    %1102 = vperm.xlu0 %1101, %v989
    %v1103 = vpop.permute.xlu0 %1102
    %1104 = vset.pattern.permute.xlu0 0
    %1105 = vperm.xlu0 %1104, %v998
    %v1106 = vpop.permute.xlu0 %1105
    %1107 = vset.pattern.permute.xlu0 0
    %1108 = vperm.xlu0 %1107, %v1007
    %v1109 = vpop.permute.xlu0 %1108
    %1110 = vset.pattern.permute.xlu0 0
    %1111 = vperm.xlu0 %1110, %v1016
    %v1112 = vpop.permute.xlu0 %1111
    %1113 = vset.pattern.permute.xlu0 0
    %1114 = vperm.xlu0 %1113, %v1025
    %v1115 = vpop.permute.xlu0 %1114
    %1116 = vset.pattern.permute.xlu0 0
    %1117 = vperm.xlu0 %1116, %v1034
    %v1118 = vpop.permute.xlu0 %1117
    %1119 = vset.pattern.permute.xlu0 0
    %1120 = vperm.xlu0 %1119, %v1043
    %v1121 = vpop.permute.xlu0 %1120
    %1122 = vset.pattern.permute.xlu0 0
    %1123 = vperm.xlu0 %1122, %v1052
    %v1124 = vpop.permute.xlu0 %1123
    %1125 = vset.pattern.permute.xlu0 0
    %1126 = vperm.xlu0 %1125, %v1061
    %v1127 = vpop.permute.xlu0 %1126
    %1128 = vset.pattern.permute.xlu0 0
    %1129 = vperm.xlu0 %1128, %v1070
    %v1130 = vpop.permute.xlu0 %1129
    %1131 = vset.pattern.permute.xlu0 0
    %1132 = vperm.xlu0 %1131, %v1079
    %v1133 = vpop.permute.xlu0 %1132
    %1134 = vset.pattern.permute.xlu0 0
    %1135 = vperm.xlu0 %1134, %v1088
    %v1136 = vpop.permute.xlu0 %1135
    %v1137 = vperm.slane %v1091, %v714
    %v1138 = vperm.slane %v1094, %v716
    %v1139 = vsel %vm718, %v1138, %v1137
    %v1140 = vperm.slane %v1097, %v720
    %v1141 = vsel %vm722, %v1140, %v1139
    %v1142 = vperm.slane %v1100, %v724
    %v1143 = vsel %vm726, %v1142, %v1141
    %v1144 = vperm.slane %v1103, %v728
    %v1145 = vsel %vm730, %v1144, %v1143
    %v1146 = vperm.slane %v1106, %v732
    %v1147 = vsel %vm734, %v1146, %v1145
    %v1148 = vperm.slane %v1109, %v736
    %v1149 = vsel %vm738, %v1148, %v1147
    %v1150 = vperm.slane %v1112, %v740
    %v1151 = vsel %vm742, %v1150, %v1149
    %v1152 = vperm.slane %v1115, %v744
    %v1153 = vsel %vm746, %v1152, %v1151
    %v1154 = vperm.slane %v1118, %v748
    %v1155 = vsel %vm750, %v1154, %v1153
    %v1156 = vperm.slane %v1121, %v752
    %v1157 = vsel %vm754, %v1156, %v1155
    %v1158 = vperm.slane %v1124, %v756
    %v1159 = vsel %vm758, %v1158, %v1157
    %v1160 = vperm.slane %v1127, %v760
    %v1161 = vsel %vm762, %v1160, %v1159
    %v1162 = vperm.slane %v1130, %v764
    %v1163 = vsel %vm766, %v1162, %v1161
    %v1164 = vperm.slane %v1133, %v768
    %v1165 = vsel %vm770, %v1164, %v1163
    %v1166 = vperm.slane %v1136, %v772
    %v1167 = vsel %vm774, %v1166, %v1165
    %v1169 = vmul.f32 %v368, %v1167
    %v1170 = vadd.f32 %v777, %v1169
    %p1171 = scmp.eq.s32.totalorder 0, 0
    // Predicated region
    $region14: #{tpu_custom_call.1} parent=1 // pred_check
      %p1172 = pneg %p1171
    $region15: #{tpu_custom_call.1} parent=1 // pred_check_branch
      %1174 = sbr.rel (%p1172) target = $region17
    $region16: #{tpu_custom_call.1} parent=1 // pred_region
      %v1175 = vlaneseq
      %v1176 = vshrl.u32 %v1175, 7
      %v1177 = vstv 0
      %v1178 = vadd.s32 %v1177, %v1176
      %v1179 = vmul.u32 %v1178, 128
      %v1180 = vadd.s32 %v1179, %v714
      %vm1181 = vcmp.lt.s32.totalorder %v1180, 2
      %v1182 = vsel %vm1181, %v1170, 0.0
      %vm1183 = vcmask 1040384
      %v1184 = vsel %vm1183, %v1182, 0.0
      %1185 = vadd.xlane.f32.xlu0 %v1184
      %v1186 = vpop.xlane.xlu0 %1185
      %v1187 = vrot.slane %v1186, 4
      %v1188 = vadd.f32 %v1186, %v1187
      %v1189 = vrot.slane %v1188, 2
      %v1190 = vadd.f32 %v1188, %v1189
      %v1191 = vrot.slane %v1190, 1
      %v1192 = vadd.f32 %v1190, %v1191
      %s1193 = vtos %v1192
      %v1194 = vstv %s1193
      %1195 = vst [vmem:[#allocation2] sm:$0xff] %v1194
    $region17: #{tpu_custom_call.1} parent=1 // pred_fallthru
      _
    %p1196 = scmp.ne.s32.totalorder 0, 0
    // Predicated region
    $region18: #{tpu_custom_call.1} parent=1 // pred_check
      %p1197 = pneg %p1196
    $region19: #{tpu_custom_call.1} parent=1 // pred_check_branch
      %1199 = sbr.rel (%p1197) target = $region21
    $region20: #{tpu_custom_call.1} parent=1 // pred_region
      %vm1200 = vcmask 1040384
      %v1201 = vsel %vm1200, %v1170, 0.0
      %1202 = vadd.xlane.f32.xlu0 %v1201
      %v1203 = vpop.xlane.xlu0 %1202
      %v1204 = vrot.slane %v1203, 4
      %v1205 = vadd.f32 %v1203, %v1204
      %v1206 = vrot.slane %v1205, 2
      %v1207 = vadd.f32 %v1205, %v1206
      %v1208 = vrot.slane %v1207, 1
      %v1209 = vadd.f32 %v1207, %v1208
      %s1210 = vtos %v1209
      %v1211 = vstv %s1210
      %1212 = vst [vmem:[#allocation2] sm:$0xff] %v1211
    $region21: #{tpu_custom_call.1} parent=1 // pred_fallthru
      _
    // Predicated region
    $region22: #{tpu_custom_call.1} parent=1 // pred_check
      _
    $region23: #{tpu_custom_call.1} parent=1 // pred_check_branch
      %1214 = sbr.rel (0) target = $region25
    $region24: #{tpu_custom_call.1} parent=1 // pred_region
      %1216 = vsyncadd [#allocation3], 0
      %s1218 = sshll.u32 [#allocation2], 4
      %s1219 = int_to_ptr.vmem [resolvable:$true] %s1218
      %s1220 = sshll.u32 %s3, 4
      %s1221 = int_to_ptr.hbm [resolvable:$true] %s1220
      %1223 = dma.vmem_to_hbm [thread:$0]  %s1219, 128, %s1221, [#allocation3]
    $region25: #{tpu_custom_call.1} parent=1 // pred_fallthru
      _
    // Predicated region
    $region26: #{tpu_custom_call.1} parent=1 // pred_check
      _
    $region27: #{tpu_custom_call.1} parent=1 // pred_check_branch
      %1225 = sbr.rel (0) target = $region29
    $region28: #{tpu_custom_call.1} parent=1 // pred_region
      %1227 = dma.done [#allocation3], 128
    $region29: #{tpu_custom_call.1} parent=1 // pred_fallthru
      _
    %1228 = vsyncpa [#allocation3], 1

</llo_original>
